<compile_context>
chip_gen: v7x
topology: tpu7x:2x2x1
jax: 0.10.0
libtpu: 0.0.40
codegen_flags: <defaults>
</compile_context>

<pallas_src>
import functools

import jax
import jax.numpy as jnp
from jax.experimental import pallas as pl
from jax.experimental.pallas import tpu as pltpu


def cbam_kernel(x_ref, wc_ref, bc_ref, wch_ref, bch_ref, sp_ref, o_ref,
                acc_sum, acc_max, ch_att, *, inv_hw):
    p = pl.program_id(1)           # 0 = pooling pass, 1 = apply pass
    t = pl.program_id(2)           # HW tile index
    n_t = pl.num_programs(2)

    x = x_ref[0]                                              # (C, tile_hw), f32
    # 1x1 conv C->C as a channel matmul on the MXU.  Operands are cast to the
    # weight dtype (bf16 for realistic C -> native MXU rate), accumulate in f32.
    F = jnp.dot(wc_ref[...], x.astype(wc_ref.dtype),
                preferred_element_type=jnp.float32) + bc_ref[...]

    @pl.when(p == 0)
    def _pool_pass():
        @pl.when(t == 0)
        def _():
            acc_sum[...] = jnp.zeros_like(acc_sum)
            acc_max[...] = jnp.full_like(acc_max, -jnp.inf)

        acc_sum[...] = acc_sum[...] + jnp.sum(F, axis=1, keepdims=True)   # (C, 1)
        acc_max[...] = jnp.maximum(acc_max[...],
                                   jnp.max(F, axis=1, keepdims=True))     # (C, 1)

        @pl.when(t == n_t - 1)
        def _():
            # avgpool + maxpool over the full HW, then the fused linear channel
            # MLP as a single (C,C)x(C,1) MXU matvec (MXU is idle at this point).
            s_col = acc_sum[...] * inv_hw + acc_max[...]                   # (C, 1)
            z = jnp.dot(wch_ref[...], s_col,
                        preferred_element_type=jnp.float32) + bch_ref[...]
            ch_att[...] = jax.nn.sigmoid(z)                                # (C, 1)

    @pl.when(p == 1)
    def _apply_pass():
        F_ = F * ch_att[...]                                  # (C, tile_hw)
        sp_avg = jnp.mean(F_, axis=0, keepdims=True)          # (1, tile_hw)
        sp_max = jnp.max(F_, axis=0, keepdims=True)           # (1, tile_hw)
        # sp_ref (SMEM, f32[3]) holds the 1x1 conv-over-[mean,max] params:
        # [w_avg, w_max, bias].
        sp_att = jax.nn.sigmoid(sp_avg * sp_ref[0] + sp_max * sp_ref[1] + sp_ref[2])
        # residual add, lane-dense store
        o_ref[0] = x + F_ * sp_att


def _vmem_capacity_bytes():
    try:
        return int(pltpu.get_tpu_info().vmem_capacity_bytes)
    except Exception:
        return 128 * 1024 * 1024


def _pick_tile_hw(HW, C, tile_budget_bytes, max_tile_hw=None):
    # Working set per grid step ~ (2 in bufs + 2 out bufs + ~3 f32 temps) per tile.
    bytes_per_tile = lambda t: 7 * C * t * 4
    limit = HW if max_tile_hw is None else min(HW, max_tile_hw)
    if limit >= HW and bytes_per_tile(HW) <= tile_budget_bytes:
        return HW                                   # whole image in one tile
    t = (limit // 128) * 128
    while t >= 128:                                 # last block dim must be a
        if HW % t == 0 and bytes_per_tile(t) <= tile_budget_bytes:   # 128-multiple
            return t
        t -= 128
    return HW   # no 128-multiple divisor fits; fall back to whole image per step


def cbam_forward(x_nchw, params, *, matmul_dtype=None, max_tile_hw=None):
    """x_nchw: (B, C, H, W) float32.  Returns (B, C, H, W) float32."""
    wc, bc, w1, b1, w2, b2, wsp, bsp = params
    B, C, H, W = x_nchw.shape
    HW = H * W

    # bf16 MXU operands run at native rate on v6e/v7x; at tiny C (the test shape)
    # the kernel is HBM-bound anyway and f32 keeps it bit-close to the reference.
    if matmul_dtype is None:
        matmul_dtype = jnp.bfloat16 if C >= 64 else jnp.float32

    # Lane-dense NCHW layout: reshape only (HW on lanes, C on sublanes).
    # NOTE: at C < 8 (test shape) half the sublanes are padding; for production
    # small-C shapes pad C to 8 wrapper-side or batch several images per step.
    x = x_nchw.reshape(B, C, HW)

    # One-off parameter prep (runs once under jit/XLA).
    wc_t = wc.T.astype(matmul_dtype)                       # (C_out, C_in): F = wc_t @ x
    bc_col = bc.reshape(C, 1).astype(jnp.float32)
    w_ch = (w1 @ w2).T.astype(jnp.float32)                 # fused linear channel MLP
    b_ch = (2.0 * (b1 @ w2 + b2)).reshape(C, 1).astype(jnp.float32)
    sp = jnp.concatenate([wsp.reshape(2), bsp.reshape(1)]).astype(jnp.float32)

    # Generation-aware VMEM budget (review items #4/#5).
    cap = _vmem_capacity_bytes()
    if cap >= 96 * 1024 * 1024:                  # 128 MiB parts (v5e / v6e)
        vmem_cap = 104 * 1024 * 1024
    else:                                        # v7x: 64 MiB, leave headroom
        vmem_cap = max(cap - 12 * 1024 * 1024, 24 * 1024 * 1024)

    weight_bytes = 2 * (C * C + C) * 4
    tile_hw = _pick_tile_hw(HW, C, int(0.75 * vmem_cap) - 2 * weight_bytes, max_tile_hw)
    n_tiles = HW // tile_hw if HW % tile_hw == 0 else 1
    if HW % tile_hw != 0:
        tile_hw, n_tiles = HW, 1

    vmem_needed = 7 * C * tile_hw * 4 + 2 * weight_bytes + (1 << 20)
    vmem_limit = int(min(max(vmem_needed, 32 * 1024 * 1024), vmem_cap))

    cost = pl.CostEstimate(
        flops=int(B * (2 * 2 * HW * C * C + 2 * C * C + 10 * HW * C)),   # conv computed in both passes
        transcendentals=int(B * (C + HW)),                               # sigmoids
        bytes_accessed=int(3 * B * HW * C * 4 + (2 * C * C + 4 * C + 3) * 4),
    )

    kernel = functools.partial(cbam_kernel, inv_hw=float(1.0 / HW))

    out = pl.pallas_call(
        kernel,
        out_shape=jax.ShapeDtypeStruct((B, C, HW), jnp.float32),
        grid_spec=pltpu.PrefetchScalarGridSpec(
            num_scalar_prefetch=0,
            grid=(B, 2, n_tiles),                # (image, pass, HW tile)
            in_specs=[
                # x tile; pl.Buffered(3) is an option here if DMA is still exposed
                # after tiling (costs VMEM that could go to a bigger tile instead).
                pl.BlockSpec((1, C, tile_hw), lambda b, p, t: (b, 0, t)),
                pl.BlockSpec((C, C), lambda b, p, t: (0, 0)),   # 1x1 conv weight (transposed)
                pl.BlockSpec((C, 1), lambda b, p, t: (0, 0)),   # 1x1 conv bias (column)
                pl.BlockSpec((C, C), lambda b, p, t: (0, 0)),   # fused channel-MLP weight
                pl.BlockSpec((C, 1), lambda b, p, t: (0, 0)),   # fused channel-MLP bias
                pl.BlockSpec(memory_space=pltpu.MemorySpace.SMEM),  # spatial-conv scalars
            ],
            # Pass 0 pins the output index at tile 0 (never written -> never
            # flushed); pass 1 walks the tiles so each block is stored exactly once.
            out_specs=pl.BlockSpec((1, C, tile_hw), lambda b, p, t: (b, 0, p * t)),
            scratch_shapes=[
                pltpu.VMEM((C, 1), jnp.float32),   # sum-over-HW accumulator
                pltpu.VMEM((C, 1), jnp.float32),   # max-over-HW accumulator
                pltpu.VMEM((C, 1), jnp.float32),   # sigmoid(channel logits)
            ],
        ),
        compiler_params=pltpu.CompilerParams(
            dimension_semantics=("parallel", "arbitrary", "arbitrary"),
            vmem_limit_bytes=vmem_limit,
        ),
        cost_estimate=cost,
    )(x, wc_t, bc_col, w_ch, b_ch, sp)

    return out.reshape(B, C, H, W)


def cbam_reference(x_nchw, params):
    """Pure-JAX reference (mirrors the PyTorch module, un-fused MLP)."""
    wc, bc, w1, b1, w2, b2, wsp, bsp = params
    x = jnp.transpose(x_nchw, (0, 2, 3, 1))                       # (B,H,W,C)
    F = jnp.einsum('bhwc,cd->bhwd', x, wc) + bc                   # 1x1 conv C->C
    f_avg = jnp.mean(F, axis=(1, 2), keepdims=True)               # (B,1,1,C)
    f_max = jnp.max(F, axis=(1, 2), keepdims=True)
    mlp = lambda v: (v @ w1 + b1) @ w2 + b2
    ch = jax.nn.sigmoid(mlp(f_avg) + mlp(f_max))                  # (B,1,1,C)
    F_ = F * ch
    sp_avg = jnp.mean(F_, axis=-1, keepdims=True)                 # (B,H,W,1)
    sp_max = jnp.max(F_, axis=-1, keepdims=True)
    sp = jax.nn.sigmoid(sp_avg * wsp[0, 0] + sp_max * wsp[0, 1] + bsp[0, 0])
    out = x + F_ * sp
    return jnp.transpose(out, (0, 3, 1, 2))


def init_params(key, C, M):
    ks = jax.random.split(key, 8)
    wc = jax.random.normal(ks[0], (C, C), jnp.float32) * 0.3
    bc = jax.random.normal(ks[1], (1, C), jnp.float32) * 0.1
    w1 = jax.random.normal(ks[2], (C, M), jnp.float32) * 0.3
    b1 = jax.random.normal(ks[3], (1, M), jnp.float32) * 0.1
    w2 = jax.random.normal(ks[4], (M, C), jnp.float32) * 0.3
    b2 = jax.random.normal(ks[5], (1, C), jnp.float32) * 0.1
    wsp = jax.random.normal(ks[6], (1, 2), jnp.float32) * 0.3
    bsp = jax.random.normal(ks[7], (1, 1), jnp.float32) * 0.1
    return (wc, bc, w1, b1, w2, b2, wsp, bsp)


if __name__ == "__main__":
    B, C, H, W = 2, 4, 16, 16
    channels_rescale_value = 0.5
    M = int(C * channels_rescale_value)   # = 2

    key = jax.random.PRNGKey(0)
    kx, kp = jax.random.split(key)
    x = jax.random.normal(kx, (B, C, H, W), jnp.float32)
    params = init_params(kp, C, M)

    # max_tile_hw=128 forces two HW tiles per image here so the two-pass
    # pool/apply + accumulator path is actually exercised at this small shape.
    out = cbam_forward(x, params, max_tile_hw=128)
    out = jax.block_until_ready(out)

    ref = cbam_reference(x, params)
    assert out.shape == (B, C, H, W)
    assert jnp.allclose(out, ref, atol=1e-4, rtol=1e-4), "mismatch vs reference"

    print("KERNEL_OK")
</pallas_src>

<mosaic_0001>
module attributes {stable_mosaic.version = 11 : i64} {
  func.func @cbam_kernel(%arg0: i32, %arg1: i32, %arg2: i32, %arg3: memref<1x4x128xf32, #tpu.memory_space<vmem>>, %arg4: memref<4x4xf32, #tpu.memory_space<vmem>>, %arg5: memref<4x1xf32, #tpu.memory_space<vmem>>, %arg6: memref<4x4xf32, #tpu.memory_space<vmem>>, %arg7: memref<4x1xf32, #tpu.memory_space<vmem>>, %arg8: memref<3xf32, #tpu.memory_space<smem>>, %arg9: memref<1x4x128xf32, #tpu.memory_space<vmem>>, %arg10: memref<4x1xf32, #tpu.memory_space<vmem>>, %arg11: memref<4x1xf32, #tpu.memory_space<vmem>>, %arg12: memref<4x1xf32, #tpu.memory_space<vmem>>) attributes {dimension_semantics = [#tpu.dimension_semantics<parallel>, #tpu.dimension_semantics<arbitrary>, #tpu.dimension_semantics<arbitrary>], iteration_bounds = array<i64: 2, 2, 2>, scalar_prefetch = 0 : i64, scratch_operands = 3 : i64, tpu.core_type = #tpu.core_type<tc>, window_params = [{transform_indices = @transform_0, window_bounds = array<i64: 1, 4, 128>}, {pipeline_mode = #tpu.pipeline_mode<synchronous>, transform_indices = @transform_1, window_bounds = array<i64: 4, 4>}, {pipeline_mode = #tpu.pipeline_mode<synchronous>, transform_indices = @transform_2, window_bounds = array<i64: 4, 1>}, {pipeline_mode = #tpu.pipeline_mode<synchronous>, transform_indices = @transform_3, window_bounds = array<i64: 4, 4>}, {pipeline_mode = #tpu.pipeline_mode<synchronous>, transform_indices = @transform_4, window_bounds = array<i64: 4, 1>}, {transform_indices = @transform_5, window_bounds = array<i64: 3>}, {transform_indices = @transform_6, window_bounds = array<i64: 1, 4, 128>}]} {
    %c0 = arith.constant 0 : index
    %c0_0 = arith.constant 0 : index
    %c0_1 = arith.constant 0 : index
    %0 = vector.load %arg3[%c0, %c0_0, %c0_1] : memref<1x4x128xf32, #tpu.memory_space<vmem>>, vector<1x4x128xf32>
    %1 = vector.shape_cast %0 : vector<1x4x128xf32> to vector<4x128xf32>
    %c0_2 = arith.constant 0 : index
    %c0_3 = arith.constant 0 : index
    %2 = vector.load %arg4[%c0_2, %c0_3] : memref<4x4xf32, #tpu.memory_space<vmem>>, vector<4x4xf32>
    %cst = arith.constant dense<0.000000e+00> : vector<4x128xf32>
    %3 = tpu.matmul %2, %1, %cst {dimension_numbers = #tpu.dot_dimension_numbers<[1], [0], [0], [1], [0, 0, 1, 1], [], []>} : vector<4x4xf32>, vector<4x128xf32>, vector<4x128xf32> -> vector<4x128xf32>
    %c0_4 = arith.constant 0 : index
    %c0_5 = arith.constant 0 : index
    %4 = vector.load %arg5[%c0_4, %c0_5] : memref<4x1xf32, #tpu.memory_space<vmem>>, vector<4x1xf32>
    %5 = vector.broadcast %4 : vector<4x1xf32> to vector<4x128xf32>
    %6 = arith.addf %3, %5 : vector<4x128xf32>
    %c0_i32 = arith.constant 0 : i32
    %7 = arith.cmpi eq, %arg1, %c0_i32 : i32
    %8 = arith.extui %7 : i1 to i32
    %c0_i32_6 = arith.constant 0 : i32
    %9 = arith.cmpi ne, %8, %c0_i32_6 : i32
    scf.if %9 {
      %c0_i32_8 = arith.constant 0 : i32
      %13 = arith.cmpi eq, %arg2, %c0_i32_8 : i32
      %14 = arith.extui %13 : i1 to i32
      %c0_i32_9 = arith.constant 0 : i32
      %15 = arith.cmpi ne, %14, %c0_i32_9 : i32
      scf.if %15 {
        %cst_22 = arith.constant 0.000000e+00 : f32
        %29 = vector.broadcast %cst_22 : f32 to vector<4x1xf32>
        %c0_23 = arith.constant 0 : index
        %c0_24 = arith.constant 0 : index
        %30 = vector.load %arg10[%c0_23, %c0_24] : memref<4x1xf32, #tpu.memory_space<vmem>>, vector<4x1xf32>
        tpu.vector_store %arg10[%c0_23, %c0_24], %29 {strides = array<i32>} : memref<4x1xf32, #tpu.memory_space<vmem>>, vector<4x1xf32>,
        %cst_25 = arith.constant 0xFF800000 : f32
        %31 = vector.broadcast %cst_25 : f32 to vector<4x1xf32>
        %c0_26 = arith.constant 0 : index
        %c0_27 = arith.constant 0 : index
        %32 = vector.load %arg11[%c0_26, %c0_27] : memref<4x1xf32, #tpu.memory_space<vmem>>, vector<4x1xf32>
        tpu.vector_store %arg11[%c0_26, %c0_27], %31 {strides = array<i32>} : memref<4x1xf32, #tpu.memory_space<vmem>>, vector<4x1xf32>,
      } else {
      }
      %c0_10 = arith.constant 0 : index
      %c0_11 = arith.constant 0 : index
      %16 = vector.load %arg10[%c0_10, %c0_11] : memref<4x1xf32, #tpu.memory_space<vmem>>, vector<4x1xf32>
      %cst_12 = arith.constant dense<0.000000e+00> : vector<4xf32>
      %17 = vector.multi_reduction <add>, %6, %cst_12 [1] : vector<4x128xf32> to vector<4xf32>
      %18 = vector.shape_cast %17 : vector<4xf32> to vector<4x1xf32>
      %19 = arith.addf %16, %18 : vector<4x1xf32>
      %c0_13 = arith.constant 0 : index
      %c0_14 = arith.constant 0 : index
      %20 = vector.load %arg10[%c0_13, %c0_14] : memref<4x1xf32, #tpu.memory_space<vmem>>, vector<4x1xf32>
      tpu.vector_store %arg10[%c0_13, %c0_14], %19 {strides = array<i32>} : memref<4x1xf32, #tpu.memory_space<vmem>>, vector<4x1xf32>,
      %c0_15 = arith.constant 0 : index
      %c0_16 = arith.constant 0 : index
      %21 = vector.load %arg11[%c0_15, %c0_16] : memref<4x1xf32, #tpu.memory_space<vmem>>, vector<4x1xf32>
      %cst_17 = arith.constant dense<0xFF800000> : vector<4xf32>
      %22 = vector.multi_reduction <maximumf>, %6, %cst_17 [1] : vector<4x128xf32> to vector<4xf32>
      %23 = vector.shape_cast %22 : vector<4xf32> to vector<4x1xf32>
      %24 = arith.maximumf %21, %23 : vector<4x1xf32>
      %c0_18 = arith.constant 0 : index
      %c0_19 = arith.constant 0 : index
      %25 = vector.load %arg11[%c0_18, %c0_19] : memref<4x1xf32, #tpu.memory_space<vmem>>, vector<4x1xf32>
      tpu.vector_store %arg11[%c0_18, %c0_19], %24 {strides = array<i32>} : memref<4x1xf32, #tpu.memory_space<vmem>>, vector<4x1xf32>,
      %c1_i32_20 = arith.constant 1 : i32
      %26 = arith.cmpi eq, %arg2, %c1_i32_20 : i32
      %27 = arith.extui %26 : i1 to i32
      %c0_i32_21 = arith.constant 0 : i32
      %28 = arith.cmpi ne, %27, %c0_i32_21 : i32
      scf.if %28 {
        %c0_22 = arith.constant 0 : index
        %c0_23 = arith.constant 0 : index
        %29 = vector.load %arg10[%c0_22, %c0_23] : memref<4x1xf32, #tpu.memory_space<vmem>>, vector<4x1xf32>
        %cst_24 = arith.constant 3.906250e-03 : f32
        %30 = vector.broadcast %cst_24 : f32 to vector<4x1xf32>
        %31 = arith.mulf %29, %30 : vector<4x1xf32>
        %c0_25 = arith.constant 0 : index
        %c0_26 = arith.constant 0 : index
        %32 = vector.load %arg11[%c0_25, %c0_26] : memref<4x1xf32, #tpu.memory_space<vmem>>, vector<4x1xf32>
        %33 = arith.addf %31, %32 : vector<4x1xf32>
        %c0_27 = arith.constant 0 : index
        %c0_28 = arith.constant 0 : index
        %34 = vector.load %arg6[%c0_27, %c0_28] : memref<4x4xf32, #tpu.memory_space<vmem>>, vector<4x4xf32>
        %cst_29 = arith.constant dense<0.000000e+00> : vector<4x1xf32>
        %35 = tpu.matmul %34, %33, %cst_29 {dimension_numbers = #tpu.dot_dimension_numbers<[1], [0], [0], [1], [0, 0, 1, 1], [], []>} : vector<4x4xf32>, vector<4x1xf32>, vector<4x1xf32> -> vector<4x1xf32>
        %c0_30 = arith.constant 0 : index
        %c0_31 = arith.constant 0 : index
        %36 = vector.load %arg7[%c0_30, %c0_31] : memref<4x1xf32, #tpu.memory_space<vmem>>, vector<4x1xf32>
        %37 = arith.addf %35, %36 : vector<4x1xf32>
        %38 = arith.negf %37 : vector<4x1xf32>
        %39 = math.exp %38 : vector<4x1xf32>
        %cst_32 = arith.constant 1.000000e+00 : f32
        %40 = vector.broadcast %cst_32 : f32 to vector<4x1xf32>
        %41 = arith.addf %40, %39 : vector<4x1xf32>
        %42 = arith.divf %40, %41 : vector<4x1xf32>
        %c0_33 = arith.constant 0 : index
        %c0_34 = arith.constant 0 : index
        %43 = vector.load %arg12[%c0_33, %c0_34] : memref<4x1xf32, #tpu.memory_space<vmem>>, vector<4x1xf32>
        tpu.vector_store %arg12[%c0_33, %c0_34], %42 {strides = array<i32>} : memref<4x1xf32, #tpu.memory_space<vmem>>, vector<4x1xf32>,
      } else {
      }
    } else {
    }
    %c1_i32 = arith.constant 1 : i32
    %10 = arith.cmpi eq, %arg1, %c1_i32 : i32
    %11 = arith.extui %10 : i1 to i32
    %c0_i32_7 = arith.constant 0 : i32
    %12 = arith.cmpi ne, %11, %c0_i32_7 : i32
    scf.if %12 {
      %c0_8 = arith.constant 0 : index
      %c0_9 = arith.constant 0 : index
      %13 = vector.load %arg12[%c0_8, %c0_9] : memref<4x1xf32, #tpu.memory_space<vmem>>, vector<4x1xf32>
      %14 = vector.broadcast %13 : vector<4x1xf32> to vector<4x128xf32>
      %15 = arith.mulf %6, %14 : vector<4x128xf32>
      %cst_10 = arith.constant dense<0.000000e+00> : vector<128xf32>
      %16 = vector.multi_reduction <add>, %15, %cst_10 [0] : vector<4x128xf32> to vector<128xf32>
      %17 = vector.shape_cast %16 : vector<128xf32> to vector<1x128xf32>
      %cst_11 = arith.constant 4.000000e+00 : f32
      %18 = vector.broadcast %cst_11 : f32 to vector<1x128xf32>
      %19 = arith.divf %17, %18 : vector<1x128xf32>
      %cst_12 = arith.constant dense<0xFF800000> : vector<128xf32>
      %20 = vector.multi_reduction <maximumf>, %15, %cst_12 [0] : vector<4x128xf32> to vector<128xf32>
      %21 = vector.shape_cast %20 : vector<128xf32> to vector<1x128xf32>
      %c0_13 = arith.constant 0 : index
      %22 = memref.load %arg8[%c0_13] : memref<3xf32, #tpu.memory_space<smem>>
      %23 = vector.broadcast %22 : f32 to vector<1x128xf32>
      %24 = arith.mulf %19, %23 : vector<1x128xf32>
      %c1 = arith.constant 1 : index
      %25 = memref.load %arg8[%c1] : memref<3xf32, #tpu.memory_space<smem>>
      %26 = vector.broadcast %25 : f32 to vector<1x128xf32>
      %27 = arith.mulf %21, %26 : vector<1x128xf32>
      %28 = arith.addf %24, %27 : vector<1x128xf32>
      %c2 = arith.constant 2 : index
      %29 = memref.load %arg8[%c2] : memref<3xf32, #tpu.memory_space<smem>>
      %30 = vector.broadcast %29 : f32 to vector<1x128xf32>
      %31 = arith.addf %28, %30 : vector<1x128xf32>
      %32 = arith.negf %31 : vector<1x128xf32>
      %33 = math.exp %32 : vector<1x128xf32>
      %cst_14 = arith.constant 1.000000e+00 : f32
      %34 = vector.broadcast %cst_14 : f32 to vector<1x128xf32>
      %35 = arith.addf %34, %33 : vector<1x128xf32>
      %36 = arith.divf %34, %35 : vector<1x128xf32>
      %37 = vector.broadcast %36 : vector<1x128xf32> to vector<4x128xf32>
      %38 = arith.mulf %15, %37 : vector<4x128xf32>
      %39 = arith.addf %1, %38 : vector<4x128xf32>
      %c0_15 = arith.constant 0 : index
      %c0_16 = arith.constant 0 : index
      %c0_17 = arith.constant 0 : index
      %40 = vector.load %arg9[%c0_15, %c0_16, %c0_17] : memref<1x4x128xf32, #tpu.memory_space<vmem>>, vector<1x4x128xf32>
      %41 = vector.shape_cast %40 : vector<1x4x128xf32> to vector<4x128xf32>
      %42 = vector.shape_cast %39 : vector<4x128xf32> to vector<1x4x128xf32>
      tpu.vector_store %arg9[%c0_15, %c0_16, %c0_17], %42 {strides = array<i32>} : memref<1x4x128xf32, #tpu.memory_space<vmem>>, vector<1x4x128xf32>,
    } else {
    }
    return
  }
  func.func @transform_0(%arg0: i32, %arg1: i32, %arg2: i32) -> (i32, i32, i32) {
    %c0_i32 = arith.constant 0 : i32
    %c0_i32_0 = arith.constant 0 : i32
    return %arg0, %c0_i32, %arg2 : i32, i32, i32
  }
  func.func @transform_1(%arg0: i32, %arg1: i32, %arg2: i32) -> (i32, i32) {
    %c0_i32 = arith.constant 0 : i32
    %c0_i32_0 = arith.constant 0 : i32
    %c0_i32_1 = arith.constant 0 : i32
    return %c0_i32, %c0_i32_0 : i32, i32
  }
  func.func @transform_2(%arg0: i32, %arg1: i32, %arg2: i32) -> (i32, i32) {
    %c0_i32 = arith.constant 0 : i32
    %c0_i32_0 = arith.constant 0 : i32
    %c0_i32_1 = arith.constant 0 : i32
    return %c0_i32, %c0_i32_0 : i32, i32
  }
  func.func @transform_3(%arg0: i32, %arg1: i32, %arg2: i32) -> (i32, i32) {
    %c0_i32 = arith.constant 0 : i32
    %c0_i32_0 = arith.constant 0 : i32
    %c0_i32_1 = arith.constant 0 : i32
    return %c0_i32, %c0_i32_0 : i32, i32
  }
  func.func @transform_4(%arg0: i32, %arg1: i32, %arg2: i32) -> (i32, i32) {
    %c0_i32 = arith.constant 0 : i32
    %c0_i32_0 = arith.constant 0 : i32
    %c0_i32_1 = arith.constant 0 : i32
    return %c0_i32, %c0_i32_0 : i32, i32
  }
  func.func @transform_5(%arg0: i32, %arg1: i32, %arg2: i32) -> i32 {
    %c0_i32 = arith.constant 0 : i32
    %c0_i32_0 = arith.constant 0 : i32
    return %c0_i32 : i32
  }
  func.func @transform_6(%arg0: i32, %arg1: i32, %arg2: i32) -> (i32, i32, i32) {
    %0 = arith.muli %arg1, %arg2 : i32
    %c0_i32 = arith.constant 0 : i32
    %c0_i32_0 = arith.constant 0 : i32
    return %arg0, %c0_i32, %0 : i32, i32, i32
  }
}

</mosaic_0001>

<llo_original>
// kernel: tpu_custom_call.1
$region0: #{tpu_custom_call.1}
  #allocation0 [shape = 'u32[]', space=smem, size = 0x4, offset = 0x4, fixed_abs, tag = 'smem constant byte address 0x4 - core index']
  #allocation1 [shape = 'u32[144,128]{1,0:T(1,128)}', space=vmem, size = 0x12000, scoped, tag = 'internal scratch']
  #allocation2 [shape = 'f32[4,1]{1,0:T(4,128)}', space=vmem, size = 0x800, scoped, tag = 'scratch operand']
  #allocation3 [shape = 'f32[4,1]{1,0:T(4,128)}', space=vmem, size = 0x800, scoped, tag = 'scratch operand']
  #allocation4 [shape = 'f32[4,1]{1,0:T(4,128)}', space=vmem, size = 0x800, scoped, tag = 'scratch operand']
  %s0 = inlined_call_operand.hbm [shape: f32[2,4,256], index: 0, kind: input, shape index: {}]
  %s1 = inlined_call_operand.vmem [shape: f32[4,4], index: 1, kind: input, shape index: {}]
  %s2 = inlined_call_operand.vmem [shape: f32[4,1], index: 2, kind: input, shape index: {}]
  %s3 = inlined_call_operand.vmem [shape: f32[4,4], index: 3, kind: input, shape index: {}]
  %s4 = inlined_call_operand.vmem [shape: f32[4,1], index: 4, kind: input, shape index: {}]
  %s5 = inlined_call_operand.vmem [shape: f32[3], index: 5, kind: input, shape index: {}]
  %s6 = inlined_call_operand.hbm [shape: f32[2,4,256], index: 6, kind: output, shape index: {}]
  %s7 = sld [smem:[#allocation0]]
  $region81: #{tpu_custom_call.1} parent=0
    _
  %s9 = ssub.s32 1, %s7
  %s10 = scalar_select 0, %s9, %s7
  $region1: #{tpu_custom_call.1} parent=0
    #allocation5 [shape = 'u8[4096]{0}', space=vmem, size = 0x1000, scoped, tag = 'input window, operand 0']
    #allocation6 [shape = 's32[2]{0}', space=sflag, size = 0x8, scoped, tag = 'scoped memory for tpu_custom_call.1']
    #allocation7 [shape = 's32[2]{0}', space=sflag, size = 0x8, scoped, tag = 'scoped memory for tpu_custom_call.1']
    #allocation8 [shape = 's32[2]{0}', space=sflag, size = 0x8, scoped, tag = 'scoped memory for tpu_custom_call.1']
    #allocation9 [shape = 'u8[512]{0}', space=smem, size = 0x200, scoped, tag = 'input window, operand 5, single buffered']
    #allocation10 [shape = 'u8[4096]{0}', space=vmem, size = 0x1000, scoped, tag = 'output window, operand 0']
    %11 = vsyncpa [#allocation6], 0
    %s12 = scalar_lea.sflag [#allocation6], 1
    %13 = vsyncpa %s12, 0
    %14 = vsyncpa [#allocation8], 0
    %15 = vsyncpa [#allocation7], 0
    %s16 = scalar_lea.sflag [#allocation7], 1
    %17 = vsyncpa %s16, 0
    loop: start=0, step=1, limit=10
    $region2: #{tpu_custom_call.1} parent=1 // loop_pre_header
      _
    $region3: #{tpu_custom_call.1} parent=1 // loop_header
      %s19 = sphi 0, %s23
      %p20 = scmp.ge.s32.totalorder %s19, 10
      %s26 = sphi 0, %s45
      %s27 = sphi 0, %s41
      %s28 = sphi 0, %s37
      %s29 = sphi 0, %s26
      %s30 = sphi 0, %s27
      %s31 = sphi 0, %s28
      %s32 = sphi 0, %s29
      %s33 = sphi 0, %s30
      %s34 = sphi 0, %s31
      %s50 = sphi 0, %s52
      %s53 = sphi 0, %s50
      %s54 = sphi 0, %s53
      %s70 = sphi 0, %s54
      %s74 = sphi 0, %s74
      %s76 = sphi 0, %s74
      %s77 = sphi 0, %s76
      %s91 = sphi 0, %s77
      %s95 = sphi 0, %s95
      %s97 = sphi 0, %s95
      %s98 = sphi 0, %s97
      %s112 = sphi 0, %s98
      %s116 = sphi 0, %s116
      %s118 = sphi 0, %s116
      %s119 = sphi 0, %s118
      %s133 = sphi 0, %s119
      %s137 = sphi 0, %s137
      %s139 = sphi 0, %s137
      %s140 = sphi 0, %s139
      %s154 = sphi 0, %s140
      %s158 = sphi 0, %s158
      %s160 = sphi 0, %s158
      %s161 = sphi 0, %s160
      %s175 = sphi 0, %s161
      %s185 = sphi 0, %s187
      %s188 = sphi 0, %s185
      %s189 = sphi 0, %s188
      %s205 = sphi 0, %s189
    $region4: #{tpu_custom_call.1} parent=1 // loop_header_branch
      %22 = sbr.rel (%p20) target = $region8
    $region5: #{tpu_custom_call.1} parent=1 // loop_body
      %s24 = ssub.s32 %s19, 1
      %s25 = ssub.s32 %s19, 2
      %s35 = sadd.s32 1, %s28
      %p36 = scmp.ge.s32.totalorder %s35, 2
      %s37 = scalar_select %p36, 0, %s35
      %s38 = sadd.s32 1, %s27
      %s39 = scalar_select %p36, %s38, %s27
      %p40 = scmp.ge.s32.totalorder %s39, 2
      %s41 = scalar_select %p40, 0, %s39
      %s42 = sadd.s32 1, %s26
      %s43 = scalar_select %p40, %s42, %s26
      %p44 = scmp.ge.s32.totalorder %s43, 2
      %s45 = scalar_select %p44, 0, %s43
      %s46 = ssub.s32 %s26, %s45
      %s47 = ssub.s32 %s28, %s37
      %s48 = sor.u32 %s46, %s47
      %p49 = scmp.eq.s32.totalorder %s48, 0
      %s51 = sadd.s32 %s50, 1
      %s52 = scalar_select %p49, %s50, %s51
      %p55 = pneg %p49
      %p56 = scmp.eq.s32.totalorder %s19, 7
      %p57 = por %p55, %p56
      %p58 = scmp.ne.s32.totalorder %s50, %s53
      %p59 = scmp.eq.s32.totalorder %s19, 0
      %p60 = por %p58, %p59
      %p61 = scmp.ne.s32.totalorder %s50, %s53
      %p62 = scmp.eq.s32.totalorder %s24, 7
      %p63 = por %p61, %p62
      %p64 = scmp.ne.s32.totalorder %s53, %s54
      %p65 = scmp.eq.s32.totalorder %s24, 0
      %p66 = por %p64, %p65
      %p67 = scmp.ne.s32.totalorder %s53, %s54
      %p68 = scmp.eq.s32.totalorder %s25, 7
      %p69 = por %p67, %p68
      %p71 = scmp.ne.s32.totalorder %s54, %s70
      %p72 = scmp.eq.s32.totalorder %s25, 0
      %p73 = por %p71, %p72
      %s75 = sadd.s32 %s74, 1
      %p78 = scmp.eq.s32.totalorder %s19, 7
      %p79 = scmp.ne.s32.totalorder %s74, %s76
      %p80 = scmp.eq.s32.totalorder %s19, 0
      %p81 = por %p79, %p80
      %p82 = scmp.ne.s32.totalorder %s74, %s76
      %p83 = scmp.eq.s32.totalorder %s24, 7
      %p84 = por %p82, %p83
      %p85 = scmp.ne.s32.totalorder %s76, %s77
      %p86 = scmp.eq.s32.totalorder %s24, 0
      %p87 = por %p85, %p86
      %p88 = scmp.ne.s32.totalorder %s76, %s77
      %p89 = scmp.eq.s32.totalorder %s25, 7
      %p90 = por %p88, %p89
      %p92 = scmp.ne.s32.totalorder %s77, %s91
      %p93 = scmp.eq.s32.totalorder %s25, 0
      %p94 = por %p92, %p93
      %s96 = sadd.s32 %s95, 1
      %p99 = scmp.eq.s32.totalorder %s19, 7
      %p100 = scmp.ne.s32.totalorder %s95, %s97
      %p101 = scmp.eq.s32.totalorder %s19, 0
      %p102 = por %p100, %p101
      %p103 = scmp.ne.s32.totalorder %s95, %s97
      %p104 = scmp.eq.s32.totalorder %s24, 7
      %p105 = por %p103, %p104
      %p106 = scmp.ne.s32.totalorder %s97, %s98
      %p107 = scmp.eq.s32.totalorder %s24, 0
      %p108 = por %p106, %p107
      %p109 = scmp.ne.s32.totalorder %s97, %s98
      %p110 = scmp.eq.s32.totalorder %s25, 7
      %p111 = por %p109, %p110
      %p113 = scmp.ne.s32.totalorder %s98, %s112
      %p114 = scmp.eq.s32.totalorder %s25, 0
      %p115 = por %p113, %p114
      %s117 = sadd.s32 %s116, 1
      %p120 = scmp.eq.s32.totalorder %s19, 7
      %p121 = scmp.ne.s32.totalorder %s116, %s118
      %p122 = scmp.eq.s32.totalorder %s19, 0
      %p123 = por %p121, %p122
      %p124 = scmp.ne.s32.totalorder %s116, %s118
      %p125 = scmp.eq.s32.totalorder %s24, 7
      %p126 = por %p124, %p125
      %p127 = scmp.ne.s32.totalorder %s118, %s119
      %p128 = scmp.eq.s32.totalorder %s24, 0
      %p129 = por %p127, %p128
      %p130 = scmp.ne.s32.totalorder %s118, %s119
      %p131 = scmp.eq.s32.totalorder %s25, 7
      %p132 = por %p130, %p131
      %p134 = scmp.ne.s32.totalorder %s119, %s133
      %p135 = scmp.eq.s32.totalorder %s25, 0
      %p136 = por %p134, %p135
      %s138 = sadd.s32 %s137, 1
      %p141 = scmp.eq.s32.totalorder %s19, 7
      %p142 = scmp.ne.s32.totalorder %s137, %s139
      %p143 = scmp.eq.s32.totalorder %s19, 0
      %p144 = por %p142, %p143
      %p145 = scmp.ne.s32.totalorder %s137, %s139
      %p146 = scmp.eq.s32.totalorder %s24, 7
      %p147 = por %p145, %p146
      %p148 = scmp.ne.s32.totalorder %s139, %s140
      %p149 = scmp.eq.s32.totalorder %s24, 0
      %p150 = por %p148, %p149
      %p151 = scmp.ne.s32.totalorder %s139, %s140
      %p152 = scmp.eq.s32.totalorder %s25, 7
      %p153 = por %p151, %p152
      %p155 = scmp.ne.s32.totalorder %s140, %s154
      %p156 = scmp.eq.s32.totalorder %s25, 0
      %p157 = por %p155, %p156
      %s159 = sadd.s32 %s158, 1
      %p162 = scmp.eq.s32.totalorder %s19, 7
      %p163 = scmp.ne.s32.totalorder %s158, %s160
      %p164 = scmp.eq.s32.totalorder %s19, 0
      %p165 = por %p163, %p164
      %p166 = scmp.ne.s32.totalorder %s158, %s160
      %p167 = scmp.eq.s32.totalorder %s24, 7
      %p168 = por %p166, %p167
      %p169 = scmp.ne.s32.totalorder %s160, %s161
      %p170 = scmp.eq.s32.totalorder %s24, 0
      %p171 = por %p169, %p170
      %p172 = scmp.ne.s32.totalorder %s160, %s161
      %p173 = scmp.eq.s32.totalorder %s25, 7
      %p174 = por %p172, %p173
      %p176 = scmp.ne.s32.totalorder %s161, %s175
      %p177 = scmp.eq.s32.totalorder %s25, 0
      %p178 = por %p176, %p177
      %s179 = smul.u32 %s27, %s28
      %s180 = smul.u32 %s41, %s37
      %s181 = ssub.s32 %s26, %s45
      %s182 = ssub.s32 %s179, %s180
      %s183 = sor.u32 %s181, %s182
      %p184 = scmp.eq.s32.totalorder %s183, 0
      %s186 = sadd.s32 %s185, 1
      %s187 = scalar_select %p184, %s185, %s186
      %p190 = pneg %p184
      %p191 = scmp.eq.s32.totalorder %s19, 7
      %p192 = por %p190, %p191
      %p193 = scmp.ne.s32.totalorder %s185, %s188
      %p194 = scmp.eq.s32.totalorder %s19, 0
      %p195 = por %p193, %p194
      %p196 = scmp.ne.s32.totalorder %s185, %s188
      %p197 = scmp.eq.s32.totalorder %s24, 7
      %p198 = por %p196, %p197
      %p199 = scmp.ne.s32.totalorder %s188, %s189
      %p200 = scmp.eq.s32.totalorder %s24, 0
      %p201 = por %p199, %p200
      %p202 = scmp.ne.s32.totalorder %s188, %s189
      %p203 = scmp.eq.s32.totalorder %s25, 7
      %p204 = por %p202, %p203
      %p206 = scmp.ne.s32.totalorder %s189, %s205
      %p207 = scmp.eq.s32.totalorder %s25, 0
      %p208 = por %p206, %p207
      %p209 = scmp.le.s32.totalorder 1, %s19
      %p210 = scmp.lt.s32.totalorder %s19, 9
      %p211 = pnand %p209, %p210
      %p212 = pneg %p211
      // Predicated region
      $region9: #{tpu_custom_call.1} parent=5 // pred_check
        _
      $region10: #{tpu_custom_call.1} parent=5 // pred_check_branch
        %214 = sbr.rel (%p211) target = $region12
      $region11: #{tpu_custom_call.1} parent=5 // pred_region
        %s215 = ssub.s32 %s19, 1
        // Predicated region
        $region13: #{tpu_custom_call.1} parent=11 // pred_check
          %p216 = pneg %p87
        $region14: #{tpu_custom_call.1} parent=11 // pred_check_branch
          %218 = sbr.rel (%p216) target = $region16
        $region15: #{tpu_custom_call.1} parent=11 // pred_region
          _
        $region16: #{tpu_custom_call.1} parent=11 // pred_fallthru
          _
        // Predicated region
        $region17: #{tpu_custom_call.1} parent=11 // pred_check
          %p219 = pneg %p108
        $region18: #{tpu_custom_call.1} parent=11 // pred_check_branch
          %221 = sbr.rel (%p219) target = $region20
        $region19: #{tpu_custom_call.1} parent=11 // pred_region
          _
        $region20: #{tpu_custom_call.1} parent=11 // pred_fallthru
          _
        // Predicated region
        $region21: #{tpu_custom_call.1} parent=11 // pred_check
          %p222 = pneg %p129
        $region22: #{tpu_custom_call.1} parent=11 // pred_check_branch
          %224 = sbr.rel (%p222) target = $region24
        $region23: #{tpu_custom_call.1} parent=11 // pred_region
          _
        $region24: #{tpu_custom_call.1} parent=11 // pred_fallthru
          _
        // Predicated region
        $region25: #{tpu_custom_call.1} parent=11 // pred_check
          %p225 = pneg %p150
        $region26: #{tpu_custom_call.1} parent=11 // pred_check_branch
          %227 = sbr.rel (%p225) target = $region28
        $region27: #{tpu_custom_call.1} parent=11 // pred_region
          _
        $region28: #{tpu_custom_call.1} parent=11 // pred_fallthru
          _
        // Predicated region
        $region29: #{tpu_custom_call.1} parent=11 // pred_check
          %p228 = pneg %p171
        $region30: #{tpu_custom_call.1} parent=11 // pred_check_branch
          %230 = sbr.rel (%p228) target = $region32
        $region31: #{tpu_custom_call.1} parent=11 // pred_region
          %s232 = ssub.s32 16, 16
          %233 = vsyncadd [#allocation8], %s232
          %s235 = sshll.u32 %s5, 4
          %s236 = int_to_ptr.vmem [resolvable:$true] %s235
          %238 = dma.vmem_to_smem %s236, 16, [#allocation9], [#allocation8]
        $region32: #{tpu_custom_call.1} parent=11 // pred_fallthru
          _
      $region12: #{tpu_custom_call.1} parent=5 // pred_fallthru
        _
      %p239 = scmp.lt.s32.totalorder %s19, 8
      // Predicated region
      $region33: #{tpu_custom_call.1} parent=5 // pred_check
        %p240 = pneg %p239
      $region34: #{tpu_custom_call.1} parent=5 // pred_check_branch
        %242 = sbr.rel (%p240) target = $region36
      $region35: #{tpu_custom_call.1} parent=5 // pred_region
        // Predicated region
        $region37: #{tpu_custom_call.1} parent=35 // pred_check
          %p243 = pneg %p60
        $region38: #{tpu_custom_call.1} parent=35 // pred_check_branch
          %245 = sbr.rel (%p243) target = $region40
        $region39: #{tpu_custom_call.1} parent=35 // pred_region
          %s246 = sand.u32 %s50, 1
          %s247 = scalar_lea.sflag [#allocation6], %s246
          %s248 = sand.u32 %s50, 1
          %s249 = smul.addr %s248, 4
          %s250 = scalar_lea.vmem [#allocation5], %s249
          %s252 = ssub.s32 64, 64
          %253 = vsyncadd %s247, %s252
          %s254 = smul.addr %s26, 2
          %s255 = sadd.s32 %s28, %s254
          %s256 = smul.addr %s255, 64
          %s257 = scalar_lea.hbm %s0, %s256
          %s259 = sshll.u32 %s250, 4
          %s260 = int_to_ptr.vmem [resolvable:$true] %s259
          %262 = dma.hbm_to_vmem [thread:$0]  %s257, 64, %s260, %s247
        $region40: #{tpu_custom_call.1} parent=35 // pred_fallthru
          _
      $region36: #{tpu_custom_call.1} parent=5 // pred_fallthru
        _
      %p263 = scmp.le.s32.totalorder 1, %s19
      %p264 = scmp.lt.s32.totalorder %s19, 9
      %p265 = pnand %p263, %p264
      %p266 = pneg %p265
      // Predicated region
      $region41: #{tpu_custom_call.1} parent=5 // pred_check
        _
      $region42: #{tpu_custom_call.1} parent=5 // pred_check_branch
        %268 = sbr.rel (%p265) target = $region44
      $region43: #{tpu_custom_call.1} parent=5 // pred_region
        %s269 = ssub.s32 %s19, 1
        %s270 = sand.u32 %s53, 1
        %s271 = scalar_lea.sflag [#allocation6], %s270
        %s272 = sand.u32 %s53, 1
        %s273 = smul.addr %s272, 4
        %s274 = scalar_lea.vmem [#allocation5], %s273
        // Predicated region
        $region45: #{tpu_custom_call.1} parent=43 // pred_check
          %p275 = pneg %p66
        $region46: #{tpu_custom_call.1} parent=43 // pred_check_branch
          %277 = sbr.rel (%p275) target = $region48
        $region47: #{tpu_custom_call.1} parent=43 // pred_region
          %278 = dma.done %s271, 64
        $region48: #{tpu_custom_call.1} parent=43 // pred_fallthru
          _
        // Predicated region
        $region49: #{tpu_custom_call.1} parent=43 // pred_check
          %p279 = pneg %p171
        $region50: #{tpu_custom_call.1} parent=43 // pred_check_branch
          %281 = sbr.rel (%p279) target = $region52
        $region51: #{tpu_custom_call.1} parent=43 // pred_region
          %282 = dma.done [#allocation8], 16
        $region52: #{tpu_custom_call.1} parent=43 // pred_fallthru
          _
        %283 = sfence
        %s284 = sand.u32 %s53, 1
        %s285 = scalar_lea.sflag [#allocation6], %s284
        %s286 = sand.u32 %s53, 1
        %s287 = smul.addr %s286, 4
        %s288 = scalar_lea.vmem [#allocation5], %s287
        %p289 = pneg %p66
        %p290 = pneg %p63
        %p291 = pneg %p87
        %p292 = pneg %p84
        %p293 = pneg %p108
        %p294 = pneg %p105
        %p295 = pneg %p129
        %p296 = pneg %p126
        %p297 = pneg %p150
        %p298 = pneg %p147
        %p299 = pneg %p171
        %p300 = pneg %p168
        %p301 = pneg %p201
        %p302 = pneg %p198
        %s303 = sand.u32 %s188, 1
        %s304 = scalar_lea.sflag [#allocation7], %s303
        %s305 = sand.u32 %s188, 1
        %s306 = smul.addr %s305, 4
        %s307 = scalar_lea.vmem [#allocation10], %s306
        %s308 = smul.u32 %s30, %s31
        %v309 = vld [vmem:[%s274] sm:$0xf]
        %v310 = vld [vmem:[%s1] sm:$0xf]
        %v311 = vld [vmem:[%s2] sm:$0xf]
        %313 = vset.pattern.permute.xlu0 0
        %314 = vperm.xlu0 %313, %v311
        %v315 = vpop.permute.xlu0 %314
        %vm317 = vcmask 31744
        %v319 = vsel %vm317, %v310, 0
        %vm321 = vcmask 1043456
        %v323 = vsel %vm321, %v309, 0
        %325 = vmatprep.subr.mxu0 0.0
        %326 = vmatpush1.msra.mxu0 %v323
        %327 = vmatprep.subr.mxu0 0.0
        %328 = vmatpush1.msra.mxu0 0.0
        %329 = vmatprep.subr.mxu0 0.0
        %330 = vmatpush1.msra.mxu0 0.0
        %331 = vmatprep.subr.mxu0 0.0
        %332 = vmatpush1.msra.mxu0 0.0
        %333 = vmatprep.subr.mxu0 0.0
        %334 = vmatpush1.msra.mxu0 0.0
        %335 = vmatprep.subr.mxu0 0.0
        %336 = vmatpush1.msra.mxu0 0.0
        %337 = vmatprep.subr.mxu0 0.0
        %338 = vmatpush1.msra.mxu0 0.0
        %339 = vmatprep.subr.mxu0 0.0
        %340 = vmatpush1.msra.mxu0 0.0
        %341 = vmatprep.subr.mxu0 0.0
        %342 = vmatpush1.msra.mxu0 0.0
        %343 = vmatprep.subr.mxu0 0.0
        %344 = vmatpush1.msra.mxu0 0.0
        %345 = vmatprep.subr.mxu0 0.0
        %346 = vmatpush1.msra.mxu0 0.0
        %347 = vmatprep.subr.mxu0 0.0
        %348 = vmatpush1.msra.mxu0 0.0
        %349 = vmatprep.subr.mxu0 0.0
        %350 = vmatpush1.msra.mxu0 0.0
        %351 = vmatprep.subr.mxu0 0.0
        %352 = vmatpush1.msra.mxu0 0.0
        %353 = vmatprep.subr.mxu0 0.0
        %354 = vmatpush1.msra.mxu0 0.0
        %355 = vmatprep.subr.mxu0 0.0
        %356 = vmatpush1.msra.mxu0 0.0
        %357 = vmatprep.subr.mxu0 0.0
        %358 = vmatpush1.msra.mxu0 0.0
        %359 = vmatprep.subr.mxu0 0.0
        %360 = vmatpush1.msra.mxu0 0.0
        %361 = vmatprep.subr.mxu0 0.0
        %362 = vmatpush1.msra.mxu0 0.0
        %363 = vmatprep.subr.mxu0 0.0
        %364 = vmatpush1.msra.mxu0 0.0
        %365 = vmatprep.subr.mxu0 0.0
        %366 = vmatpush1.msra.mxu0 0.0
        %367 = vmatprep.subr.mxu0 0.0
        %368 = vmatpush1.msra.mxu0 0.0
        %369 = vmatprep.subr.mxu0 0.0
        %370 = vmatpush1.msra.mxu0 0.0
        %371 = vmatprep.subr.mxu0 0.0
        %372 = vmatpush1.msra.mxu0 0.0
        %373 = vmatprep.subr.mxu0 0.0
        %374 = vmatpush1.msra.mxu0 0.0
        %375 = vmatprep.subr.mxu0 0.0
        %376 = vmatpush1.msra.mxu0 0.0
        %377 = vmatprep.subr.mxu0 0.0
        %378 = vmatpush1.msra.mxu0 0.0
        %379 = vmatprep.subr.mxu0 0.0
        %380 = vmatpush1.msra.mxu0 0.0
        %381 = vmatprep.subr.mxu0 0.0
        %382 = vmatpush1.msra.mxu0 0.0
        %383 = vmatprep.subr.mxu0 0.0
        %384 = vmatpush1.msra.mxu0 0.0
        %385 = vmatprep.subr.mxu0 0.0
        %386 = vmatpush1.msra.mxu0 0.0
        %387 = vmatprep.subr.mxu0 0.0
        %388 = vmatpush1.msra.mxu0 0.0
        %389 = vmatprep.mubr.f32.mxu0 0.0
        %390 = vmatmul.mubr.f32.gmra.mrb[0].mxu0 %v319
        %v391 = vpop.f32.mrb[0].mxu0
        %v392 = vadd.f32 %v315, %v391
        %v393 = vpop.f32.mrb[0].mxu0
        %394 = vdwg.mxu0
        %p395 = scmp.eq.s32.totalorder %s30, 0
        // Predicated region
        $region53: #{tpu_custom_call.1} parent=43 // pred_check
          %p396 = pneg %p395
        $region54: #{tpu_custom_call.1} parent=43 // pred_check_branch
          %398 = sbr.rel (%p396) target = $region56
        $region55: #{tpu_custom_call.1} parent=43 // pred_region
          %p399 = scmp.eq.s32.totalorder %s31, 0
          // Predicated region
          $region57: #{tpu_custom_call.1} parent=55 // pred_check
            %p400 = pneg %p399
          $region58: #{tpu_custom_call.1} parent=55 // pred_check_branch
            %402 = sbr.rel (%p400) target = $region60
          $region59: #{tpu_custom_call.1} parent=55 // pred_region
            %vm403 = vcmask 3072
            %404 = vst.msk [vmem:[#allocation2] sm:$0xf] %vm403, 0.0
            %405 = vst.msk [vmem:[#allocation3] sm:$0xf] %vm403, -inf
          $region60: #{tpu_custom_call.1} parent=55 // pred_fallthru
            _
          %v406 = vld [vmem:[#allocation2] sm:$0xf]
          %v407 = vsel %vm321, %v392, 0.0
          %408 = vadd.xlane.f32.xlu0 %v407
          %v409 = vpop.xlane.xlu0 %408
          %v410 = vadd.f32 %v406, %v409
          %vm411 = vcmask 3072
          %412 = vst.msk [vmem:[#allocation2] sm:$0xf] %vm411, %v410
          %v413 = vld [vmem:[#allocation3] sm:$0xf]
          %v414 = vsel %vm321, %v392, -inf
          %415 = vmax.xlane.f32.xlu0 %v414
          %v416 = vpop.xlane.xlu0 %415
          %v417 = vmax.f32 %v413, %v416
          %418 = vst.msk [vmem:[#allocation3] sm:$0xf] %vm411, %v417
          %p419 = scmp.eq.s32.totalorder %s31, 1
          // Predicated region
          $region61: #{tpu_custom_call.1} parent=55 // pred_check
            %p420 = pneg %p419
          $region62: #{tpu_custom_call.1} parent=55 // pred_check_branch
            %422 = sbr.rel (%p420) target = $region64
          $region63: #{tpu_custom_call.1} parent=55 // pred_region
            %v423 = vld [vmem:[#allocation2] sm:$0xf]
            %v424 = vmul.f32 %v423, 0.00390625
            %v425 = vld [vmem:[#allocation3] sm:$0xf]
            %v426 = vadd.f32 %v424, %v425
            %v427 = vld [vmem:[%s3] sm:$0xf]
            %v428 = vld [vmem:[%s4] sm:$0xf]
            %v430 = vsel %vm317, %v427, 0
            %v433 = vsel %vm321, %v426, 0
            %435 = vmatprep.subr.mxu0 0.0
            %436 = vmatpush1.msra.mxu0 %v433
            %437 = vmatprep.subr.mxu0 0.0
            %438 = vmatpush1.msra.mxu0 0.0
            %439 = vmatprep.subr.mxu0 0.0
            %440 = vmatpush1.msra.mxu0 0.0
            %441 = vmatprep.subr.mxu0 0.0
            %442 = vmatpush1.msra.mxu0 0.0
            %443 = vmatprep.subr.mxu0 0.0
            %444 = vmatpush1.msra.mxu0 0.0
            %445 = vmatprep.subr.mxu0 0.0
            %446 = vmatpush1.msra.mxu0 0.0
            %447 = vmatprep.subr.mxu0 0.0
            %448 = vmatpush1.msra.mxu0 0.0
            %449 = vmatprep.subr.mxu0 0.0
            %450 = vmatpush1.msra.mxu0 0.0
            %451 = vmatprep.subr.mxu0 0.0
            %452 = vmatpush1.msra.mxu0 0.0
            %453 = vmatprep.subr.mxu0 0.0
            %454 = vmatpush1.msra.mxu0 0.0
            %455 = vmatprep.subr.mxu0 0.0
            %456 = vmatpush1.msra.mxu0 0.0
            %457 = vmatprep.subr.mxu0 0.0
            %458 = vmatpush1.msra.mxu0 0.0
            %459 = vmatprep.subr.mxu0 0.0
            %460 = vmatpush1.msra.mxu0 0.0
            %461 = vmatprep.subr.mxu0 0.0
            %462 = vmatpush1.msra.mxu0 0.0
            %463 = vmatprep.subr.mxu0 0.0
            %464 = vmatpush1.msra.mxu0 0.0
            %465 = vmatprep.subr.mxu0 0.0
            %466 = vmatpush1.msra.mxu0 0.0
            %467 = vmatprep.subr.mxu0 0.0
            %468 = vmatpush1.msra.mxu0 0.0
            %469 = vmatprep.subr.mxu0 0.0
            %470 = vmatpush1.msra.mxu0 0.0
            %471 = vmatprep.subr.mxu0 0.0
            %472 = vmatpush1.msra.mxu0 0.0
            %473 = vmatprep.subr.mxu0 0.0
            %474 = vmatpush1.msra.mxu0 0.0
            %475 = vmatprep.subr.mxu0 0.0
            %476 = vmatpush1.msra.mxu0 0.0
            %477 = vmatprep.subr.mxu0 0.0
            %478 = vmatpush1.msra.mxu0 0.0
            %479 = vmatprep.subr.mxu0 0.0
            %480 = vmatpush1.msra.mxu0 0.0
            %481 = vmatprep.subr.mxu0 0.0
            %482 = vmatpush1.msra.mxu0 0.0
            %483 = vmatprep.subr.mxu0 0.0
            %484 = vmatpush1.msra.mxu0 0.0
            %485 = vmatprep.subr.mxu0 0.0
            %486 = vmatpush1.msra.mxu0 0.0
            %487 = vmatprep.subr.mxu0 0.0
            %488 = vmatpush1.msra.mxu0 0.0
            %489 = vmatprep.subr.mxu0 0.0
            %490 = vmatpush1.msra.mxu0 0.0
            %491 = vmatprep.subr.mxu0 0.0
            %492 = vmatpush1.msra.mxu0 0.0
            %493 = vmatprep.subr.mxu0 0.0
            %494 = vmatpush1.msra.mxu0 0.0
            %495 = vmatprep.subr.mxu0 0.0
            %496 = vmatpush1.msra.mxu0 0.0
            %497 = vmatprep.subr.mxu0 0.0
            %498 = vmatpush1.msra.mxu0 0.0
            %499 = vmatprep.mubr.f32.mxu0 0.0
            %500 = vmatmul.mubr.f32.gmra.mrb[0].mxu0 %v430
            %v501 = vpop.f32.mrb[0].mxu0
            %v502 = vadd.f32 %v428, %v501
            %v503 = vpop.f32.mrb[0].mxu0
            %504 = vdwg.mxu0
            %v505 = vxor.u32 %v502, 2147483648
            %v506 = vmul.f32 %v505, 1.442695
            %v507 = vpow.pop %v506
            %v508 = vadd.f32 %v507, 1.0
            %v509 = vrcp.pop %v508
            %v510 = vmul.f32 1.0, %v509
            %511 = vst.msk [vmem:[#allocation4] sm:$0xf] %vm411, %v510
          $region64: #{tpu_custom_call.1} parent=55 // pred_fallthru
            _
        $region56: #{tpu_custom_call.1} parent=43 // pred_fallthru
          _
        %p512 = scmp.eq.s32.totalorder %s30, 1
        // Predicated region
        $region65: #{tpu_custom_call.1} parent=43 // pred_check
          %p513 = pneg %p512
        $region66: #{tpu_custom_call.1} parent=43 // pred_check_branch
          %515 = sbr.rel (%p513) target = $region68
        $region67: #{tpu_custom_call.1} parent=43 // pred_region
          %v516 = vld [vmem:[#allocation4] sm:$0xf]
          %518 = vset.pattern.permute.xlu0 0
          %519 = vperm.xlu0 %518, %v516
          %v520 = vpop.permute.xlu0 %519
          %v522 = vmul.f32 %v392, %v520
          %v523 = vsel %vm321, %v522, 0.0
          %v524 = vrot.slane %v523, 4
          %v525 = vadd.f32 %v523, %v524
          %v526 = vrot.slane %v525, 2
          %v527 = vadd.f32 %v525, %v526
          %v528 = vrot.slane %v527, 1
          %v529 = vadd.f32 %v527, %v528
          %v530 = vrcp.pop 4.0
          %v531 = vmul.f32 %v529, %v530
          %v532 = vsel %vm321, %v522, -inf
          %v533 = vrot.slane %v532, 4
          %v534 = vmax.f32 %v532, %v533
          %v535 = vrot.slane %v534, 2
          %v536 = vmax.f32 %v534, %v535
          %v537 = vrot.slane %v536, 1
          %v538 = vmax.f32 %v536, %v537
          %s539 = sld [smem:[#allocation9]]
          %v540 = vstv %s539
          %v541 = vmul.f32 %v531, %v540
          %s542 = sld [smem:[#allocation9 + $0x1]]
          %v543 = vstv %s542
          %v544 = vmul.f32 %v538, %v543
          %v545 = vadd.f32 %v541, %v544
          %s546 = sld [smem:[#allocation9 + $0x2]]
          %v547 = vstv %s546
          %v548 = vadd.f32 %v545, %v547
          %v549 = vxor.u32 %v548, 2147483648
          %v550 = vmul.f32 %v549, 1.442695
          %v551 = vpow.pop %v550
          %v552 = vadd.f32 %v551, 1.0
          %v553 = vrcp.pop %v552
          %v554 = vmul.f32 1.0, %v553
          %v555 = vmul.f32 %v522, %v554
          %v556 = vadd.f32 %v309, %v555
          %557 = vst [vmem:[%s307] sm:$0xf] %v556
        $region68: #{tpu_custom_call.1} parent=43 // pred_fallthru
          _
        %s558 = sand.u32 %s188, 1
        %s559 = scalar_lea.sflag [#allocation7], %s558
        %s560 = sand.u32 %s188, 1
        %s561 = smul.addr %s560, 4
        %s562 = scalar_lea.vmem [#allocation10], %s561
        // Predicated region
        $region69: #{tpu_custom_call.1} parent=43 // pred_check
          %p563 = pneg %p198
        $region70: #{tpu_custom_call.1} parent=43 // pred_check_branch
          %565 = sbr.rel (%p563) target = $region72
        $region71: #{tpu_custom_call.1} parent=43 // pred_region
          %s566 = smul.u32 %s30, %s31
          %s568 = ssub.s32 64, 64
          %569 = vsyncadd %s559, %s568
          %s570 = smul.addr %s29, 2
          %s571 = sadd.s32 %s566, %s570
          %s572 = smul.addr %s571, 64
          %s573 = scalar_lea.hbm %s6, %s572
          %s575 = sshll.u32 %s562, 4
          %s576 = int_to_ptr.vmem [resolvable:$true] %s575
          %578 = dma.vmem_to_hbm [thread:$0]  %s576, 64, %s573, %s559
        $region72: #{tpu_custom_call.1} parent=43 // pred_fallthru
          _
      $region44: #{tpu_custom_call.1} parent=5 // pred_fallthru
        _
      %p579 = scmp.le.s32.totalorder 2, %s19
      // Predicated region
      $region73: #{tpu_custom_call.1} parent=5 // pred_check
        %p580 = pneg %p579
      $region74: #{tpu_custom_call.1} parent=5 // pred_check_branch
        %582 = sbr.rel (%p580) target = $region76
      $region75: #{tpu_custom_call.1} parent=5 // pred_region
        %s583 = ssub.s32 %s19, 2
        // Predicated region
        $region77: #{tpu_custom_call.1} parent=75 // pred_check
          %p584 = pneg %p204
        $region78: #{tpu_custom_call.1} parent=75 // pred_check_branch
          %586 = sbr.rel (%p584) target = $region80
        $region79: #{tpu_custom_call.1} parent=75 // pred_region
          %s587 = sand.u32 %s189, 1
          %s588 = scalar_lea.sflag [#allocation7], %s587
          %s589 = sand.u32 %s189, 1
          %s590 = smul.addr %s589, 4
          %s591 = scalar_lea.vmem [#allocation10], %s590
          %592 = dma.done %s588, 64
        $region80: #{tpu_custom_call.1} parent=75 // pred_fallthru
          _
      $region76: #{tpu_custom_call.1} parent=5 // pred_fallthru
        _
    $region6: #{tpu_custom_call.1} parent=1 // loop_footer
      %s23 = sadd.s32 1, %s19
    $region7: #{tpu_custom_call.1} parent=1 // loop_footer_branch
      %18 = sbr.rel target = $region3
    $region8: #{tpu_custom_call.1} parent=1 // loop_exit
      _
    %593 = vsyncpa [#allocation6], 1
    %s594 = scalar_lea.sflag [#allocation6], 1
    %595 = vsyncpa %s594, 1
    %596 = vsyncpa [#allocation7], 1
    %s597 = scalar_lea.sflag [#allocation7], 1
    %598 = vsyncpa %s597, 1
    %599 = vsyncpa [#allocation8], 1
    %s600 = scalar_lea.sflag [#allocation8], 1
    %601 = vsyncpa %s600, 1

</llo_original>
